<compile_context>
chip_gen: v6e
topology: v6e:2x2x1
jax: 0.10.0
libtpu: 0.0.40
codegen_flags: <defaults>
</compile_context>

<pallas_src>
import functools

import jax
import jax.numpy as jnp
from jax.experimental import pallas as pl
from jax.experimental.pallas import tpu as pltpu


def _round_up(x, m):
    return (x + m - 1) // m * m


def _resample_kernel(inp_ref, coord_ref, out_ref, *, IH, IW, C):
    # inp_ref:   (C*IH, IW) f32 -- resident across output tiles (1 DMA per n)
    # coord_ref: (2, T)     f32 -- row 0 = x (width), row 1 = y (height)
    # out_ref:   (C, T)     f32
    T = coord_ref.shape[1]

    x = coord_ref[0:1, :]  # (1, T)
    y = coord_ref[1:2, :]  # (1, T)

    # align_corners=True: the module's normalize/un-normalize round trip is the
    # identity, so just clamp the raw voxel coords (padding_mode='border').
    xp = jnp.clip(x, 0.0, IW - 1.0)
    yp = jnp.clip(y, 0.0, IH - 1.0)

    # Top-left corner indices + bilinear weights.  Clamping x0<=IW-2, y0<=IH-2
    # keeps both contributing columns/rows in range.
    x0f = jnp.clip(jnp.floor(xp), 0.0, float(IW - 2))
    y0f = jnp.clip(jnp.floor(yp), 0.0, float(IH - 2))
    wx = xp - x0f  # (1, T)
    wy = yp - y0f  # (1, T)
    x0 = x0f.astype(jnp.int32)
    y0 = y0f.astype(jnp.int32)

    # --- x interpolation on the MXU ----------------------------------------
    # Wx: (IW, T) select matrix with (1-wx) at row x0 and wx at row x0+1.
    colx = jax.lax.broadcasted_iota(jnp.int32, (IW, T), 0)
    dx = colx - x0
    Wx = jnp.where(dx == 0, 1.0 - wx, jnp.where(dx == 1, wx, 0.0))

    # (C*IH, IW) @ (IW, T) -> (C*IH, T): every input row x-interpolated at
    # every output pixel.  Note: default TPU matmul precision was verified
    # against the 1e-4 reference tolerance; use precision='highest' if a
    # tighter tolerance is required (we are not MXU-bound).
    tmp = jnp.dot(inp_ref[...], Wx, preferred_element_type=jnp.float32)
    tmp = tmp.reshape(C, IH, T)

    # --- y interpolation on the VPU/XLU ------------------------------------
    # Wy: (IH, T) select matrix with (1-wy) at row y0 and wy at row y0+1.
    rowy = jax.lax.broadcasted_iota(jnp.int32, (IH, T), 0)
    dy = rowy - y0
    Wy = jnp.where(dy == 0, 1.0 - wy, jnp.where(dy == 1, wy, 0.0))

    out_ref[...] = jnp.sum(tmp * Wy[None, :, :], axis=1).astype(out_ref.dtype)


def resampler_pallas(inp, coord_grid, coord_dim=1, mode="bilinear",
                     padding_mode="border", tile_ohw=None):
    """Pallas equivalent of Resampler.forward for 2D inputs.

    inp:        (N, C, IH, IW)
    coord_grid: coordinate field with a size-2 channel axis at `coord_dim`
                (default layout (N, 2, OH, OW)), raw voxel coords in (x, y).
    returns:    (N, C, OH, OW) in inp.dtype
    """
    assert mode == "bilinear", "only bilinear implemented"
    assert padding_mode == "border", "only border padding implemented"

    N, C, IH, IW = inp.shape
    assert IH >= 2 and IW >= 2, "spatial dims must be >= 2"
    assert coord_grid.shape[coord_dim] == 2, "only 2D resampling implemented"

    # Coordinate layout (N, 2, OHW).  For the default coord_dim=1 the moveaxis
    # is an identity and the reshape is free (no transposed HBM copy).
    cg = jnp.moveaxis(coord_grid, coord_dim, 1)
    OH, OW = cg.shape[2], cg.shape[3]
    OHW = OH * OW
    coords = cg.reshape(N, 2, OHW).astype(jnp.float32)

    # Pad tiny channel counts to one full sublane so matmul results and output
    # stores are unmasked.
    C_pad = 8 if C < 8 else C
    inp_f = inp.astype(jnp.float32)
    if C_pad != C:
        inp_f = jnp.pad(inp_f, ((0, 0), (0, C_pad - C), (0, 0), (0, 0)))
    inp_flat = inp_f.reshape(N, C_pad * IH, IW)  # layout-free reshape

    # --- VMEM-aware tile selection ------------------------------------------
    try:
        vmem_cap = int(pltpu.get_tpu_info().vmem_capacity_bytes)
    except Exception:
        vmem_cap = 64 << 20  # conservative (v7x-sized) fallback
    budget = int(vmem_cap * 0.7)

    # Resident input block (double-buffered by the pipeline); VMEM lanes pad to
    # 128 regardless of IW.
    fixed_bytes = 2 * C_pad * IH * _round_up(IW, 128) * 4
    # Per-output-pixel bytes: x-interp result + y-weighted product (C_pad*IH
    # each), Wx/iota/dx, Wy/iota/dy, coord & output double buffers.
    per_lane_bytes = 4 * (2 * C_pad * IH
                          + 3 * _round_up(IW, 8)
                          + 3 * _round_up(IH, 8)
                          + 2 * 2 + 2 * C_pad)

    if tile_ohw is None:
        avail = max(budget - fixed_bytes, per_lane_bytes * 128)
        tile_ohw = max(128, min(2048, (avail // per_lane_bytes) // 128 * 128))
    tile_ohw = min(_round_up(tile_ohw, 128), _round_up(OHW, 128))

    OHW_pad = _round_up(OHW, tile_ohw)
    n_tiles = OHW_pad // tile_ohw
    if OHW_pad != OHW:
        coords = jnp.pad(coords, ((0, 0), (0, 0), (0, OHW_pad - OHW)))

    vmem_est = fixed_bytes + per_lane_bytes * tile_ohw
    vmem_limit = int(min(max(int(vmem_est * 1.25), 32 << 20),
                         int(vmem_cap * 0.9)))

    out = pl.pallas_call(
        functools.partial(_resample_kernel, IH=IH, IW=IW, C=C_pad),
        out_shape=jax.ShapeDtypeStruct((N, C_pad, OHW_pad), jnp.float32),
        grid=(N, n_tiles),
        in_specs=[
            # Input block is independent of the tile axis -> stays resident,
            # one DMA per batch element.
            pl.BlockSpec((None, C_pad * IH, IW), lambda n, t: (n, 0, 0)),
            pl.BlockSpec((None, 2, tile_ohw), lambda n, t: (n, 0, t)),
        ],
        out_specs=pl.BlockSpec((None, C_pad, tile_ohw), lambda n, t: (n, 0, t)),
        compiler_params=pltpu.CompilerParams(
            dimension_semantics=("parallel", "parallel"),
            vmem_limit_bytes=vmem_limit),
    )(inp_flat, coords)

    out = out[:, :C, :OHW]
    return out.reshape(N, C, OH, OW).astype(inp.dtype)


def _reference(inp, coord_grid, coord_dim=1):
    """Pure-JAX reference of the same forward pass (for verification)."""
    N, C, IH, IW = inp.shape
    g = jnp.moveaxis(coord_grid, coord_dim, -1)  # (N, OH, OW, 2)
    x, y = g[..., 0], g[..., 1]
    # align_corners=True round trip is the identity -> clamp raw voxel coords.
    x = jnp.clip(x, 0.0, IW - 1.0)
    y = jnp.clip(y, 0.0, IH - 1.0)
    x0 = jnp.clip(jnp.floor(x), 0.0, IW - 2)
    y0 = jnp.clip(jnp.floor(y), 0.0, IH - 2)
    wx = (x - x0)[:, None]  # (N,1,OH,OW)
    wy = (y - y0)[:, None]
    x0i = x0.astype(jnp.int32)
    y0i = y0.astype(jnp.int32)
    x1i = jnp.minimum(x0i + 1, IW - 1)
    y1i = jnp.minimum(y0i + 1, IH - 1)

    n_idx = jnp.arange(N)[:, None, None, None]
    c_idx = jnp.arange(C)[None, :, None, None]

    def gather(yy, xx):
        return inp[n_idx, c_idx, yy[:, None], xx[:, None]]

    v00 = gather(y0i, x0i)
    v01 = gather(y0i, x1i)
    v10 = gather(y1i, x0i)
    v11 = gather(y1i, x1i)
    return (v00 * (1 - wy) * (1 - wx) + v01 * (1 - wy) * wx
            + v10 * wy * (1 - wx) + v11 * wy * wx)


if __name__ == "__main__":
    key = jax.random.PRNGKey(0)
    k_img, k_grid = jax.random.split(key)

    N, C, IH, IW = 2, 4, 16, 16
    OH, OW = 8, 8

    x = jax.random.normal(k_img, (N, C, IH, IW), dtype=jnp.float32)
    # Voxel coordinates, intentionally slightly outside [0, size-1] to
    # exercise border padding.  Channel order (x, y) at dim 1.
    coord_grid = jax.random.uniform(
        k_grid, (N, 2, OH, OW), dtype=jnp.float32, minval=-2.0, maxval=IW + 1.0)

    out = resampler_pallas(x, coord_grid)
    out = jax.block_until_ready(out)

    ref = _reference(x, coord_grid)
    assert out.shape == (N, C, OH, OW)
    assert jnp.max(jnp.abs(out - ref)) < 1e-4, "mismatch vs reference"

    print("KERNEL_OK")
</pallas_src>

<mosaic_0001>
module attributes {stable_mosaic.version = 11 : i64} {
  func.func @_resample_kernel(%arg0: i32, %arg1: i32, %arg2: memref<1x128x16xf32, #tpu.memory_space<vmem>>, %arg3: memref<1x2x128xf32, #tpu.memory_space<vmem>>, %arg4: memref<1x8x128xf32, #tpu.memory_space<vmem>>) attributes {dimension_semantics = [#tpu.dimension_semantics<parallel>, #tpu.dimension_semantics<parallel>], iteration_bounds = array<i64: 2, 1>, scalar_prefetch = 0 : i64, scratch_operands = 0 : i64, tpu.core_type = #tpu.core_type<tc>, window_params = [{transform_indices = @transform_0, window_bounds = array<i64: 1, 128, 16>}, {transform_indices = @transform_1, window_bounds = array<i64: 1, 2, 128>}, {transform_indices = @transform_2, window_bounds = array<i64: 1, 8, 128>}]} {
    %c0 = arith.constant 0 : index
    %c0_0 = arith.constant 0 : index
    %c0_1 = arith.constant 0 : index
    %0 = vector.load %arg3[%c0, %c0_0, %c0_1] : memref<1x2x128xf32, #tpu.memory_space<vmem>>, vector<1x1x128xf32>
    %1 = vector.shape_cast %0 : vector<1x1x128xf32> to vector<1x128xf32>
    %c0_2 = arith.constant 0 : index
    %c1 = arith.constant 1 : index
    %c0_3 = arith.constant 0 : index
    %2 = vector.load %arg3[%c0_2, %c1, %c0_3] : memref<1x2x128xf32, #tpu.memory_space<vmem>>, vector<1x1x128xf32>
    %3 = vector.shape_cast %2 : vector<1x1x128xf32> to vector<1x128xf32>
    %cst = arith.constant 0.000000e+00 : f32
    %cst_4 = arith.constant 1.500000e+01 : f32
    %4 = vector.broadcast %cst : f32 to vector<1x128xf32>
    %5 = arith.maximumf %4, %1 : vector<1x128xf32>
    %6 = vector.broadcast %cst_4 : f32 to vector<1x128xf32>
    %7 = arith.minimumf %6, %5 : vector<1x128xf32>
    %cst_5 = arith.constant 0.000000e+00 : f32
    %cst_6 = arith.constant 1.500000e+01 : f32
    %8 = vector.broadcast %cst_5 : f32 to vector<1x128xf32>
    %9 = arith.maximumf %8, %3 : vector<1x128xf32>
    %10 = vector.broadcast %cst_6 : f32 to vector<1x128xf32>
    %11 = arith.minimumf %10, %9 : vector<1x128xf32>
    %12 = math.floor %7 : vector<1x128xf32>
    %cst_7 = arith.constant 0.000000e+00 : f32
    %cst_8 = arith.constant 1.400000e+01 : f32
    %13 = vector.broadcast %cst_7 : f32 to vector<1x128xf32>
    %14 = arith.maximumf %13, %12 : vector<1x128xf32>
    %15 = vector.broadcast %cst_8 : f32 to vector<1x128xf32>
    %16 = arith.minimumf %15, %14 : vector<1x128xf32>
    %17 = math.floor %11 : vector<1x128xf32>
    %cst_9 = arith.constant 0.000000e+00 : f32
    %cst_10 = arith.constant 1.400000e+01 : f32
    %18 = vector.broadcast %cst_9 : f32 to vector<1x128xf32>
    %19 = arith.maximumf %18, %17 : vector<1x128xf32>
    %20 = vector.broadcast %cst_10 : f32 to vector<1x128xf32>
    %21 = arith.minimumf %20, %19 : vector<1x128xf32>
    %22 = arith.subf %7, %16 : vector<1x128xf32>
    %23 = arith.subf %11, %21 : vector<1x128xf32>
    %24 = arith.fptosi %16 : vector<1x128xf32> to vector<1x128xi32>
    %25 = arith.fptosi %21 : vector<1x128xf32> to vector<1x128xi32>
    %26 = tpu.iota {dimensions = array<i32: 0>} : vector<16x128xi32>
    %27 = vector.broadcast %24 : vector<1x128xi32> to vector<16x128xi32>
    %28 = arith.subi %26, %27 : vector<16x128xi32>
    %c0_i32 = arith.constant 0 : i32
    %29 = vector.broadcast %c0_i32 : i32 to vector<16x128xi32>
    %30 = arith.cmpi eq, %28, %29 : vector<16x128xi32>
    %cst_11 = arith.constant 1.000000e+00 : f32
    %31 = vector.broadcast %cst_11 : f32 to vector<1x128xf32>
    %32 = arith.subf %31, %22 : vector<1x128xf32>
    %c1_i32 = arith.constant 1 : i32
    %33 = vector.broadcast %c1_i32 : i32 to vector<16x128xi32>
    %34 = arith.cmpi eq, %28, %33 : vector<16x128xi32>
    %cst_12 = arith.constant 0.000000e+00 : f32
    %35 = vector.shape_cast %22 : vector<1x128xf32> to vector<1x128xf32>
    %36 = vector.broadcast %35 : vector<1x128xf32> to vector<16x128xf32>
    %37 = vector.broadcast %cst_12 : f32 to vector<16x128xf32>
    %38 = arith.select %34, %36, %37 : vector<16x128xi1>, vector<16x128xf32>
    %39 = vector.shape_cast %32 : vector<1x128xf32> to vector<1x128xf32>
    %40 = vector.broadcast %39 : vector<1x128xf32> to vector<16x128xf32>
    %41 = arith.select %30, %40, %38 : vector<16x128xi1>, vector<16x128xf32>
    %c0_13 = arith.constant 0 : index
    %c0_14 = arith.constant 0 : index
    %c0_15 = arith.constant 0 : index
    %42 = vector.load %arg2[%c0_13, %c0_14, %c0_15] : memref<1x128x16xf32, #tpu.memory_space<vmem>>, vector<1x128x16xf32>
    %43 = vector.shape_cast %42 : vector<1x128x16xf32> to vector<128x16xf32>
    %cst_16 = arith.constant dense<0.000000e+00> : vector<128x128xf32>
    %44 = tpu.matmul %43, %41, %cst_16 {dimension_numbers = #tpu.dot_dimension_numbers<[1], [0], [0], [1], [0, 0, 1, 1], [], []>} : vector<128x16xf32>, vector<16x128xf32>, vector<128x128xf32> -> vector<128x128xf32>
    %45 = vector.shape_cast %44 : vector<128x128xf32> to vector<8x16x128xf32>
    %46 = tpu.iota {dimensions = array<i32: 0>} : vector<16x128xi32>
    %47 = vector.broadcast %25 : vector<1x128xi32> to vector<16x128xi32>
    %48 = arith.subi %46, %47 : vector<16x128xi32>
    %c0_i32_17 = arith.constant 0 : i32
    %49 = vector.broadcast %c0_i32_17 : i32 to vector<16x128xi32>
    %50 = arith.cmpi eq, %48, %49 : vector<16x128xi32>
    %cst_18 = arith.constant 1.000000e+00 : f32
    %51 = vector.broadcast %cst_18 : f32 to vector<1x128xf32>
    %52 = arith.subf %51, %23 : vector<1x128xf32>
    %c1_i32_19 = arith.constant 1 : i32
    %53 = vector.broadcast %c1_i32_19 : i32 to vector<16x128xi32>
    %54 = arith.cmpi eq, %48, %53 : vector<16x128xi32>
    %cst_20 = arith.constant 0.000000e+00 : f32
    %55 = vector.shape_cast %23 : vector<1x128xf32> to vector<1x128xf32>
    %56 = vector.broadcast %55 : vector<1x128xf32> to vector<16x128xf32>
    %57 = vector.broadcast %cst_20 : f32 to vector<16x128xf32>
    %58 = arith.select %54, %56, %57 : vector<16x128xi1>, vector<16x128xf32>
    %59 = vector.shape_cast %52 : vector<1x128xf32> to vector<1x128xf32>
    %60 = vector.broadcast %59 : vector<1x128xf32> to vector<16x128xf32>
    %61 = arith.select %50, %60, %58 : vector<16x128xi1>, vector<16x128xf32>
    %62 = vector.shape_cast %61 : vector<16x128xf32> to vector<1x16x128xf32>
    %63 = vector.broadcast %62 : vector<1x16x128xf32> to vector<8x16x128xf32>
    %64 = arith.mulf %45, %63 : vector<8x16x128xf32>
    %cst_21 = arith.constant dense<0.000000e+00> : vector<8x128xf32>
    %65 = vector.multi_reduction <add>, %64, %cst_21 [1] : vector<8x16x128xf32> to vector<8x128xf32>
    %c0_22 = arith.constant 0 : index
    %c0_23 = arith.constant 0 : index
    %c0_24 = arith.constant 0 : index
    %66 = vector.load %arg4[%c0_22, %c0_23, %c0_24] : memref<1x8x128xf32, #tpu.memory_space<vmem>>, vector<1x8x128xf32>
    %67 = vector.shape_cast %66 : vector<1x8x128xf32> to vector<8x128xf32>
    %68 = vector.shape_cast %65 : vector<8x128xf32> to vector<1x8x128xf32>
    tpu.vector_store %arg4[%c0_22, %c0_23, %c0_24], %68 {strides = array<i32>} : memref<1x8x128xf32, #tpu.memory_space<vmem>>, vector<1x8x128xf32>,
    return
  }
  func.func @transform_0(%arg0: i32, %arg1: i32) -> (i32, i32, i32) {
    %c0_i32 = arith.constant 0 : i32
    %c0_i32_0 = arith.constant 0 : i32
    %c0_i32_1 = arith.constant 0 : i32
    return %arg0, %c0_i32, %c0_i32_0 : i32, i32, i32
  }
  func.func @transform_1(%arg0: i32, %arg1: i32) -> (i32, i32, i32) {
    %c0_i32 = arith.constant 0 : i32
    %c0_i32_0 = arith.constant 0 : i32
    return %arg0, %c0_i32, %arg1 : i32, i32, i32
  }
  func.func @transform_2(%arg0: i32, %arg1: i32) -> (i32, i32, i32) {
    %c0_i32 = arith.constant 0 : i32
    %c0_i32_0 = arith.constant 0 : i32
    return %arg0, %c0_i32, %arg1 : i32, i32, i32
  }
}

</mosaic_0001>

<llo_original>
// kernel: tpu_custom_call.1
$region0: #{tpu_custom_call.1}
  #allocation0 [shape = 'u32[]', space=smem, size = 0x4, offset = 0x4, fixed_abs, tag = 'smem constant byte address 0x4 - core index']
  #allocation1 [shape = 'u32[144,128]{1,0:T(1,128)}', space=vmem, size = 0x12000, scoped, tag = 'internal scratch']
  %s0 = inlined_call_operand.vmem [shape: f32[2,128,16], index: 0, kind: input, shape index: {}]
  %s1 = inlined_call_operand.vmem [shape: f32[2,2,128], index: 1, kind: input, shape index: {}]
  %s2 = inlined_call_operand.hbm [shape: f32[2,8,128], index: 2, kind: output, shape index: {}]
  %s3 = sld [smem:[#allocation0]]
  $region41: #{tpu_custom_call.1} parent=0
    _
  %s5 = ssub.s32 1, %s3
  %s6 = scalar_select 0, %s5, %s3
  $region1: #{tpu_custom_call.1} parent=0
    #allocation2 [shape = 'u8[8192]{0}', space=vmem, size = 0x2000, scoped, tag = 'output window, operand 0']
    #allocation3 [shape = 's32[2]{0}', space=sflag, size = 0x8, scoped, tag = 'scoped memory for tpu_custom_call.1']
    %7 = vsyncpa [#allocation3], 0
    %s8 = scalar_lea.sflag [#allocation3], 1
    %9 = vsyncpa %s8, 0
    loop: start=0, step=1, limit=4
    $region2: #{tpu_custom_call.1} parent=1 // loop_pre_header
      _
    $region3: #{tpu_custom_call.1} parent=1 // loop_header
      %s11 = sphi 0, %s15
      %p12 = scmp.ge.s32.totalorder %s11, 4
      %s18 = sphi 0, %s30
      %s19 = sphi 0, %s26
      %s20 = sphi 0, %s18
      %s21 = sphi 0, %s19
      %s22 = sphi 0, %s20
      %s23 = sphi 0, %s21
      %s33 = sphi 0, %s35
      %s36 = sphi 0, %s33
      %s37 = sphi 0, %s36
      %s53 = sphi 0, %s37
      %s61 = sphi 0, %s63
      %s64 = sphi 0, %s61
      %s65 = sphi 0, %s64
      %s81 = sphi 0, %s65
      %s89 = sphi 0, %s91
      %s92 = sphi 0, %s89
      %s93 = sphi 0, %s92
      %s109 = sphi 0, %s93
    $region4: #{tpu_custom_call.1} parent=1 // loop_header_branch
      %14 = sbr.rel (%p12) target = $region8
    $region5: #{tpu_custom_call.1} parent=1 // loop_body
      %s16 = ssub.s32 %s11, 1
      %s17 = ssub.s32 %s11, 2
      %s24 = sadd.s32 1, %s19
      %p25 = scmp.ge.s32.totalorder %s24, 1
      %s26 = scalar_select %p25, 0, %s24
      %s27 = sadd.s32 1, %s18
      %s28 = scalar_select %p25, %s27, %s18
      %p29 = scmp.ge.s32.totalorder %s28, 2
      %s30 = scalar_select %p29, 0, %s28
      %s31 = ssub.s32 %s18, %s30
      %p32 = scmp.eq.s32.totalorder %s31, 0
      %s34 = sadd.s32 %s33, 1
      %s35 = scalar_select %p32, %s33, %s34
      %p38 = pneg %p32
      %p39 = scmp.eq.s32.totalorder %s11, 1
      %p40 = por %p38, %p39
      %p41 = scmp.ne.s32.totalorder %s33, %s36
      %p42 = scmp.eq.s32.totalorder %s11, 0
      %p43 = por %p41, %p42
      %p44 = scmp.ne.s32.totalorder %s33, %s36
      %p45 = scmp.eq.s32.totalorder %s16, 1
      %p46 = por %p44, %p45
      %p47 = scmp.ne.s32.totalorder %s36, %s37
      %p48 = scmp.eq.s32.totalorder %s16, 0
      %p49 = por %p47, %p48
      %p50 = scmp.ne.s32.totalorder %s36, %s37
      %p51 = scmp.eq.s32.totalorder %s17, 1
      %p52 = por %p50, %p51
      %p54 = scmp.ne.s32.totalorder %s37, %s53
      %p55 = scmp.eq.s32.totalorder %s17, 0
      %p56 = por %p54, %p55
      %s57 = ssub.s32 %s18, %s30
      %s58 = ssub.s32 %s19, %s26
      %s59 = sor.u32 %s57, %s58
      %p60 = scmp.eq.s32.totalorder %s59, 0
      %s62 = sadd.s32 %s61, 1
      %s63 = scalar_select %p60, %s61, %s62
      %p66 = pneg %p60
      %p67 = scmp.eq.s32.totalorder %s11, 1
      %p68 = por %p66, %p67
      %p69 = scmp.ne.s32.totalorder %s61, %s64
      %p70 = scmp.eq.s32.totalorder %s11, 0
      %p71 = por %p69, %p70
      %p72 = scmp.ne.s32.totalorder %s61, %s64
      %p73 = scmp.eq.s32.totalorder %s16, 1
      %p74 = por %p72, %p73
      %p75 = scmp.ne.s32.totalorder %s64, %s65
      %p76 = scmp.eq.s32.totalorder %s16, 0
      %p77 = por %p75, %p76
      %p78 = scmp.ne.s32.totalorder %s64, %s65
      %p79 = scmp.eq.s32.totalorder %s17, 1
      %p80 = por %p78, %p79
      %p82 = scmp.ne.s32.totalorder %s65, %s81
      %p83 = scmp.eq.s32.totalorder %s17, 0
      %p84 = por %p82, %p83
      %s85 = ssub.s32 %s18, %s30
      %s86 = ssub.s32 %s19, %s26
      %s87 = sor.u32 %s85, %s86
      %p88 = scmp.eq.s32.totalorder %s87, 0
      %s90 = sadd.s32 %s89, 1
      %s91 = scalar_select %p88, %s89, %s90
      %p94 = pneg %p88
      %p95 = scmp.eq.s32.totalorder %s11, 1
      %p96 = por %p94, %p95
      %p97 = scmp.ne.s32.totalorder %s89, %s92
      %p98 = scmp.eq.s32.totalorder %s11, 0
      %p99 = por %p97, %p98
      %p100 = scmp.ne.s32.totalorder %s89, %s92
      %p101 = scmp.eq.s32.totalorder %s16, 1
      %p102 = por %p100, %p101
      %p103 = scmp.ne.s32.totalorder %s92, %s93
      %p104 = scmp.eq.s32.totalorder %s16, 0
      %p105 = por %p103, %p104
      %p106 = scmp.ne.s32.totalorder %s92, %s93
      %p107 = scmp.eq.s32.totalorder %s17, 1
      %p108 = por %p106, %p107
      %p110 = scmp.ne.s32.totalorder %s93, %s109
      %p111 = scmp.eq.s32.totalorder %s17, 0
      %p112 = por %p110, %p111
      %p113 = scmp.le.s32.totalorder 1, %s11
      %p114 = scmp.lt.s32.totalorder %s11, 3
      %p115 = pnand %p113, %p114
      %p116 = pneg %p115
      // Predicated region
      $region9: #{tpu_custom_call.1} parent=5 // pred_check
        _
      $region10: #{tpu_custom_call.1} parent=5 // pred_check_branch
        %118 = sbr.rel (%p115) target = $region12
      $region11: #{tpu_custom_call.1} parent=5 // pred_region
        %s119 = ssub.s32 %s11, 1
      $region12: #{tpu_custom_call.1} parent=5 // pred_fallthru
        _
      %p120 = scmp.lt.s32.totalorder %s11, 2
      // Predicated region
      $region13: #{tpu_custom_call.1} parent=5 // pred_check
        %p121 = pneg %p120
      $region14: #{tpu_custom_call.1} parent=5 // pred_check_branch
        %123 = sbr.rel (%p121) target = $region16
      $region15: #{tpu_custom_call.1} parent=5 // pred_region
        // Predicated region
        $region17: #{tpu_custom_call.1} parent=15 // pred_check
          %p124 = pneg %p43
        $region18: #{tpu_custom_call.1} parent=15 // pred_check_branch
          %126 = sbr.rel (%p124) target = $region20
        $region19: #{tpu_custom_call.1} parent=15 // pred_region
          %p127 = scmp.lt.s32.totalorder %s18, 1
          %s128 = scalar_select %p127, %s18, 1
          %s129 = smul.addr %s128, 16
          %s130 = smul.addr %s129, 8
          %s131 = scalar_lea.vmem %s0, %s130
        $region20: #{tpu_custom_call.1} parent=15 // pred_fallthru
          _
        // Predicated region
        $region21: #{tpu_custom_call.1} parent=15 // pred_check
          %p132 = pneg %p71
        $region22: #{tpu_custom_call.1} parent=15 // pred_check_branch
          %134 = sbr.rel (%p132) target = $region24
        $region23: #{tpu_custom_call.1} parent=15 // pred_region
          %p135 = scmp.lt.s32.totalorder %s18, 1
          %s136 = scalar_select %p135, %s18, 1
          %p137 = scmp.lt.s32.totalorder %s19, 0
          %s138 = scalar_select %p137, %s19, 0
          %s139 = sadd.s32 %s138, %s136
          %s140 = smul.addr %s139, 2
          %s141 = scalar_lea.vmem %s1, %s140
        $region24: #{tpu_custom_call.1} parent=15 // pred_fallthru
          _
      $region16: #{tpu_custom_call.1} parent=5 // pred_fallthru
        _
      %p142 = scmp.le.s32.totalorder 1, %s11
      %p143 = scmp.lt.s32.totalorder %s11, 3
      %p144 = pnand %p142, %p143
      %p145 = pneg %p144
      // Predicated region
      $region25: #{tpu_custom_call.1} parent=5 // pred_check
        _
      $region26: #{tpu_custom_call.1} parent=5 // pred_check_branch
        %147 = sbr.rel (%p144) target = $region28
      $region27: #{tpu_custom_call.1} parent=5 // pred_region
        %s148 = ssub.s32 %s11, 1
        %p149 = scmp.lt.s32.totalorder %s20, 1
        %s150 = scalar_select %p149, %s20, 1
        %s151 = smul.addr %s150, 16
        %s152 = smul.addr %s151, 8
        %s153 = scalar_lea.vmem %s0, %s152
        %p154 = pneg %p49
        %p155 = pneg %p46
        %p156 = scmp.lt.s32.totalorder %s20, 1
        %s157 = scalar_select %p156, %s20, 1
        %p158 = scmp.lt.s32.totalorder %s21, 0
        %s159 = scalar_select %p158, %s21, 0
        %s160 = sadd.s32 %s159, %s157
        %s161 = smul.addr %s160, 2
        %s162 = scalar_lea.vmem %s1, %s161
        %p163 = pneg %p77
        %p164 = pneg %p74
        %p165 = pneg %p105
        %p166 = pneg %p102
        %s167 = sand.u32 %s92, 1
        %s168 = scalar_lea.sflag [#allocation3], %s167
        %s169 = sand.u32 %s92, 1
        %s170 = smul.addr %s169, 8
        %s171 = scalar_lea.vmem [#allocation2], %s170
        %p172 = scmp.lt.s32.totalorder %s20, 1
        %s173 = scalar_select %p172, %s20, 1
        %s174 = smul.addr %s173, 16
        %s175 = smul.addr %s174, 8
        %s176 = scalar_lea.vmem %s0, %s175
        %p177 = scmp.lt.s32.totalorder %s20, 1
        %s178 = scalar_select %p177, %s20, 1
        %p179 = scmp.lt.s32.totalorder %s21, 0
        %s180 = scalar_select %p179, %s21, 0
        %s181 = sadd.s32 %s180, %s178
        %s182 = smul.addr %s181, 2
        %s183 = scalar_lea.vmem %s1, %s182
        %v184 = vld [vmem:[%s183] sm:$0x1]
        %v185 = vld [vmem:[%s183 + $0x1] sm:$0x1]
        %v186 = vmax.f32 %v184, 0.0
        %v187 = vmin.f32 %v186, 15.0
        %v188 = vmax.f32 %v185, 0.0
        %v189 = vmin.f32 %v188, 15.0
        %v190 = vfloor.f32 %v187
        %v191 = vmax.f32 %v190, 0.0
        %v192 = vmin.f32 %v191, 14.0
        %v193 = vfloor.f32 %v189
        %v194 = vmax.f32 %v193, 0.0
        %v195 = vmin.f32 %v194, 14.0
        %v196 = vsub.f32 %v187, %v192
        %v197 = vsub.f32 %v189, %v195
        %v198 = vcvt.f32.s32.to.zero.pseudo %v192
        %v199 = vcvt.f32.s32.to.zero.pseudo %v195
        %v200 = vlaneseq
        %v201 = vshrl.u32 %v200, 7
        %v202 = vadd.s32 %v201, 8
        %v203 = vlaneseq
        %v204 = vshrl.u32 %v203, 7
        %v205 = vsub.s32 0, %v204
        %v206 = vrot.slane %v198, %v205
        %v207 = vsub.s32 %v201, %v206
        %v208 = vsub.s32 %v202, %v206
        %vm209 = vcmp.eq.s32.totalorder %v207, 0
        %vm210 = vcmp.eq.s32.totalorder %v208, 0
        %v211 = vsub.f32 1.0, %v196
        %vm212 = vcmp.eq.s32.totalorder %v207, 1
        %vm213 = vcmp.eq.s32.totalorder %v208, 1
        %v214 = vlaneseq
        %v215 = vshrl.u32 %v214, 7
        %v216 = vsub.s32 0, %v215
        %v217 = vrot.slane %v196, %v216
        %v218 = vsel %vm212, %v217, 0.0
        %v219 = vsel %vm213, %v217, 0.0
        %v220 = vlaneseq
        %v221 = vshrl.u32 %v220, 7
        %v222 = vsub.s32 0, %v221
        %v223 = vrot.slane %v211, %v222
        %v224 = vsel %vm209, %v223, %v218
        %v225 = vsel %vm210, %v223, %v219
        %v226 = vld [vmem:[%s176] sm:$0xff]
        %v227 = vld [vmem:[%s176 + $0x8] sm:$0xff]
        %v228 = vld [vmem:[%s176 + $0x10] sm:$0xff]
        %v229 = vld [vmem:[%s176 + $0x18] sm:$0xff]
        %v230 = vld [vmem:[%s176 + $0x20] sm:$0xff]
        %v231 = vld [vmem:[%s176 + $0x28] sm:$0xff]
        %v232 = vld [vmem:[%s176 + $0x30] sm:$0xff]
        %v233 = vld [vmem:[%s176 + $0x38] sm:$0xff]
        %v234 = vld [vmem:[%s176 + $0x40] sm:$0xff]
        %v235 = vld [vmem:[%s176 + $0x48] sm:$0xff]
        %v236 = vld [vmem:[%s176 + $0x50] sm:$0xff]
        %v237 = vld [vmem:[%s176 + $0x58] sm:$0xff]
        %v238 = vld [vmem:[%s176 + $0x60] sm:$0xff]
        %v239 = vld [vmem:[%s176 + $0x68] sm:$0xff]
        %v240 = vld [vmem:[%s176 + $0x70] sm:$0xff]
        %v241 = vld [vmem:[%s176 + $0x78] sm:$0xff]
        %vm242 = vcmask 130048
        %v244 = vsel %vm242, %v226, 0
        %v247 = vsel %vm242, %v227, 0
        %v250 = vsel %vm242, %v228, 0
        %v253 = vsel %vm242, %v229, 0
        %v256 = vsel %vm242, %v230, 0
        %v259 = vsel %vm242, %v231, 0
        %v262 = vsel %vm242, %v232, 0
        %v265 = vsel %vm242, %v233, 0
        %v268 = vsel %vm242, %v234, 0
        %v271 = vsel %vm242, %v235, 0
        %v274 = vsel %vm242, %v236, 0
        %v277 = vsel %vm242, %v237, 0
        %v280 = vsel %vm242, %v238, 0
        %v283 = vsel %vm242, %v239, 0
        %v286 = vsel %vm242, %v240, 0
        %v289 = vsel %vm242, %v241, 0
        %291 = vmatprep.subr.mxu0 0.0
        %292 = vmatpush1.msra.mxu0 0.0
        %293 = vmatprep.subr.mxu0 0.0
        %294 = vmatpush1.msra.mxu0 0.0
        %295 = vmatprep.subr.mxu0 0.0
        %296 = vmatpush1.msra.mxu0 0.0
        %297 = vmatprep.subr.mxu0 0.0
        %298 = vmatpush1.msra.mxu0 0.0
        %299 = vmatprep.subr.mxu0 0.0
        %300 = vmatpush1.msra.mxu0 0.0
        %301 = vmatprep.subr.mxu0 0.0
        %302 = vmatpush1.msra.mxu0 0.0
        %303 = vmatprep.subr.mxu0 0.0
        %304 = vmatpush1.msra.mxu0 0.0
        %305 = vmatprep.subr.mxu0 0.0
        %306 = vmatpush1.msra.mxu0 0.0
        %307 = vmatprep.subr.mxu0 0.0
        %308 = vmatpush1.msra.mxu0 0.0
        %309 = vmatprep.subr.mxu0 0.0
        %310 = vmatpush1.msra.mxu0 0.0
        %311 = vmatprep.subr.mxu0 0.0
        %312 = vmatpush1.msra.mxu0 0.0
        %313 = vmatprep.subr.mxu0 0.0
        %314 = vmatpush1.msra.mxu0 0.0
        %315 = vmatprep.subr.mxu0 0.0
        %316 = vmatpush1.msra.mxu0 0.0
        %317 = vmatprep.subr.mxu0 0.0
        %318 = vmatpush1.msra.mxu0 0.0
        %319 = vmatprep.subr.mxu0 0.0
        %320 = vmatpush1.msra.mxu0 %v225
        %321 = vmatprep.subr.mxu0 0.0
        %322 = vmatpush1.msra.mxu0 %v224
        %323 = vmatprep.subr.mxu0 0.0
        %324 = vmatpush2.msra.mxu0 0.0
        %325 = vmatprep.subr.mxu0 0.0
        %326 = vmatpush2.msra.mxu0 0.0
        %327 = vmatprep.subr.mxu0 0.0
        %328 = vmatpush2.msra.mxu0 0.0
        %329 = vmatprep.subr.mxu0 0.0
        %330 = vmatpush2.msra.mxu0 0.0
        %331 = vmatprep.subr.mxu0 0.0
        %332 = vmatpush2.msra.mxu0 0.0
        %333 = vmatprep.subr.mxu0 0.0
        %334 = vmatpush2.msra.mxu0 0.0
        %335 = vmatprep.subr.mxu0 0.0
        %336 = vmatpush2.msra.mxu0 0.0
        %337 = vmatprep.subr.mxu0 0.0
        %338 = vmatpush2.msra.mxu0 0.0
        %339 = vmatprep.subr.mxu0 0.0
        %340 = vmatpush2.msra.mxu0 0.0
        %341 = vmatprep.subr.mxu0 0.0
        %342 = vmatpush2.msra.mxu0 0.0
        %343 = vmatprep.subr.mxu0 0.0
        %344 = vmatpush2.msra.mxu0 0.0
        %345 = vmatprep.subr.mxu0 0.0
        %346 = vmatpush2.msra.mxu0 0.0
        %347 = vmatprep.subr.mxu0 0.0
        %348 = vmatpush2.msra.mxu0 0.0
        %349 = vmatprep.subr.mxu0 0.0
        %350 = vmatpush2.msra.mxu0 0.0
        %351 = vmatprep.subr.mxu0 0.0
        %352 = vmatpush2.msra.mxu0 0.0
        %353 = vmatprep.subr.mxu0 0.0
        %354 = vmatpush2.msra.mxu0 0.0
        %355 = vmatprep.mubr.f32.mxu0 0.0
        %356 = vmatmul.mubr.f32.gmra.mxu0 %v244
        %v357 = vpop.f32.mrf.mxu0
        %v358 = vadd.f32 0.0, %v357
        %v359 = vpop.f32.mrf.mxu0
        %360 = vmatprep.mubr.f32.mxu0 0.0
        %361 = vmatmul.mubr.f32.gmra.mxu0 %v247
        %v362 = vpop.f32.mrf.mxu0
        %v363 = vadd.f32 0.0, %v362
        %v364 = vpop.f32.mrf.mxu0
        %365 = vmatprep.mubr.f32.mxu0 0.0
        %366 = vmatmul.mubr.f32.gmra.mxu0 %v250
        %v367 = vpop.f32.mrf.mxu0
        %v368 = vadd.f32 0.0, %v367
        %v369 = vpop.f32.mrf.mxu0
        %370 = vmatprep.mubr.f32.mxu0 0.0
        %371 = vmatmul.mubr.f32.gmra.mxu0 %v253
        %v372 = vpop.f32.mrf.mxu0
        %v373 = vadd.f32 0.0, %v372
        %v374 = vpop.f32.mrf.mxu0
        %375 = vmatprep.mubr.f32.mxu0 0.0
        %376 = vmatmul.mubr.f32.gmra.mxu0 %v256
        %v377 = vpop.f32.mrf.mxu0
        %v378 = vadd.f32 0.0, %v377
        %v379 = vpop.f32.mrf.mxu0
        %380 = vmatprep.mubr.f32.mxu0 0.0
        %381 = vmatmul.mubr.f32.gmra.mxu0 %v259
        %v382 = vpop.f32.mrf.mxu0
        %v383 = vadd.f32 0.0, %v382
        %v384 = vpop.f32.mrf.mxu0
        %385 = vmatprep.mubr.f32.mxu0 0.0
        %386 = vmatmul.mubr.f32.gmra.mxu0 %v262
        %v387 = vpop.f32.mrf.mxu0
        %v388 = vadd.f32 0.0, %v387
        %v389 = vpop.f32.mrf.mxu0
        %390 = vmatprep.mubr.f32.mxu0 0.0
        %391 = vmatmul.mubr.f32.gmra.mxu0 %v265
        %v392 = vpop.f32.mrf.mxu0
        %v393 = vadd.f32 0.0, %v392
        %v394 = vpop.f32.mrf.mxu0
        %395 = vmatprep.mubr.f32.mxu0 0.0
        %396 = vmatmul.mubr.f32.gmra.mxu0 %v268
        %v397 = vpop.f32.mrf.mxu0
        %v398 = vadd.f32 0.0, %v397
        %v399 = vpop.f32.mrf.mxu0
        %400 = vmatprep.mubr.f32.mxu0 0.0
        %401 = vmatmul.mubr.f32.gmra.mxu0 %v271
        %v402 = vpop.f32.mrf.mxu0
        %v403 = vadd.f32 0.0, %v402
        %v404 = vpop.f32.mrf.mxu0
        %405 = vmatprep.mubr.f32.mxu0 0.0
        %406 = vmatmul.mubr.f32.gmra.mxu0 %v274
        %v407 = vpop.f32.mrf.mxu0
        %v408 = vadd.f32 0.0, %v407
        %v409 = vpop.f32.mrf.mxu0
        %410 = vmatprep.mubr.f32.mxu0 0.0
        %411 = vmatmul.mubr.f32.gmra.mxu0 %v277
        %v412 = vpop.f32.mrf.mxu0
        %v413 = vadd.f32 0.0, %v412
        %v414 = vpop.f32.mrf.mxu0
        %415 = vmatprep.mubr.f32.mxu0 0.0
        %416 = vmatmul.mubr.f32.gmra.mxu0 %v280
        %v417 = vpop.f32.mrf.mxu0
        %v418 = vadd.f32 0.0, %v417
        %v419 = vpop.f32.mrf.mxu0
        %420 = vmatprep.mubr.f32.mxu0 0.0
        %421 = vmatmul.mubr.f32.gmra.mxu0 %v283
        %v422 = vpop.f32.mrf.mxu0
        %v423 = vadd.f32 0.0, %v422
        %v424 = vpop.f32.mrf.mxu0
        %425 = vmatprep.mubr.f32.mxu0 0.0
        %426 = vmatmul.mubr.f32.gmra.mxu0 %v286
        %v427 = vpop.f32.mrf.mxu0
        %v428 = vadd.f32 0.0, %v427
        %v429 = vpop.f32.mrf.mxu0
        %430 = vmatprep.mubr.f32.mxu0 0.0
        %431 = vmatmul.mubr.f32.gmra.mxu0 %v289
        %v432 = vpop.f32.mrf.mxu0
        %v433 = vadd.f32 0.0, %v432
        %v434 = vpop.f32.mrf.mxu0
        %435 = vdwg.mxu0
        %v436 = vlaneseq
        %v437 = vshrl.u32 %v436, 7
        %v438 = vsub.s32 0, %v437
        %v439 = vrot.slane %v199, %v438
        %v440 = vsub.s32 %v201, %v439
        %v441 = vsub.s32 %v202, %v439
        %vm442 = vcmp.eq.s32.totalorder %v440, 0
        %vm443 = vcmp.eq.s32.totalorder %v441, 0
        %v444 = vsub.f32 1.0, %v197
        %vm445 = vcmp.eq.s32.totalorder %v440, 1
        %vm446 = vcmp.eq.s32.totalorder %v441, 1
        %v447 = vlaneseq
        %v448 = vshrl.u32 %v447, 7
        %v449 = vsub.s32 0, %v448
        %v450 = vrot.slane %v197, %v449
        %v451 = vsel %vm445, %v450, 0.0
        %v452 = vsel %vm446, %v450, 0.0
        %v453 = vlaneseq
        %v454 = vshrl.u32 %v453, 7
        %v455 = vsub.s32 0, %v454
        %v456 = vrot.slane %v444, %v455
        %v457 = vsel %vm442, %v456, %v451
        %v458 = vsel %vm443, %v456, %v452
        %v459 = vmul.f32 %v358, %v457
        %v460 = vmul.f32 %v363, %v458
        %v461 = vmul.f32 %v368, %v457
        %v462 = vmul.f32 %v373, %v458
        %v463 = vmul.f32 %v378, %v457
        %v464 = vmul.f32 %v383, %v458
        %v465 = vmul.f32 %v388, %v457
        %v466 = vmul.f32 %v393, %v458
        %v467 = vmul.f32 %v398, %v457
        %v468 = vmul.f32 %v403, %v458
        %v469 = vmul.f32 %v408, %v457
        %v470 = vmul.f32 %v413, %v458
        %v471 = vmul.f32 %v418, %v457
        %v472 = vmul.f32 %v423, %v458
        %v473 = vmul.f32 %v428, %v457
        %v474 = vmul.f32 %v433, %v458
        %v475 = vadd.f32 %v459, %v460
        %v476 = vrot.slane %v475, 4
        %v477 = vadd.f32 %v475, %v476
        %v478 = vrot.slane %v477, 2
        %v479 = vadd.f32 %v477, %v478
        %v480 = vrot.slane %v479, 1
        %v481 = vadd.f32 %v479, %v480
        %v482 = vadd.f32 %v461, %v462
        %v483 = vrot.slane %v482, 4
        %v484 = vadd.f32 %v482, %v483
        %v485 = vrot.slane %v484, 2
        %v486 = vadd.f32 %v484, %v485
        %v487 = vrot.slane %v486, 1
        %v488 = vadd.f32 %v486, %v487
        %v489 = vadd.f32 %v463, %v464
        %v490 = vrot.slane %v489, 4
        %v491 = vadd.f32 %v489, %v490
        %v492 = vrot.slane %v491, 2
        %v493 = vadd.f32 %v491, %v492
        %v494 = vrot.slane %v493, 1
        %v495 = vadd.f32 %v493, %v494
        %v496 = vadd.f32 %v465, %v466
        %v497 = vrot.slane %v496, 4
        %v498 = vadd.f32 %v496, %v497
        %v499 = vrot.slane %v498, 2
        %v500 = vadd.f32 %v498, %v499
        %v501 = vrot.slane %v500, 1
        %v502 = vadd.f32 %v500, %v501
        %v503 = vadd.f32 %v467, %v468
        %v504 = vrot.slane %v503, 4
        %v505 = vadd.f32 %v503, %v504
        %v506 = vrot.slane %v505, 2
        %v507 = vadd.f32 %v505, %v506
        %v508 = vrot.slane %v507, 1
        %v509 = vadd.f32 %v507, %v508
        %v510 = vadd.f32 %v469, %v470
        %v511 = vrot.slane %v510, 4
        %v512 = vadd.f32 %v510, %v511
        %v513 = vrot.slane %v512, 2
        %v514 = vadd.f32 %v512, %v513
        %v515 = vrot.slane %v514, 1
        %v516 = vadd.f32 %v514, %v515
        %v517 = vadd.f32 %v471, %v472
        %v518 = vrot.slane %v517, 4
        %v519 = vadd.f32 %v517, %v518
        %v520 = vrot.slane %v519, 2
        %v521 = vadd.f32 %v519, %v520
        %v522 = vrot.slane %v521, 1
        %v523 = vadd.f32 %v521, %v522
        %v524 = vadd.f32 %v473, %v474
        %v525 = vrot.slane %v524, 4
        %v526 = vadd.f32 %v524, %v525
        %v527 = vrot.slane %v526, 2
        %v528 = vadd.f32 %v526, %v527
        %v529 = vrot.slane %v528, 1
        %v530 = vadd.f32 %v528, %v529
        %vm539 = vcmask 1041409
        %v540 = vsel %vm539, %v488, %v481
        %vm541 = vcmask 1042434
        %v542 = vsel %vm541, %v495, %v540
        %vm543 = vcmask 1043459
        %v544 = vsel %vm543, %v502, %v542
        %vm545 = vcmask 1044484
        %v546 = vsel %vm545, %v509, %v544
        %vm547 = vcmask 1045509
        %v548 = vsel %vm547, %v516, %v546
        %vm549 = vcmask 1046534
        %v550 = vsel %vm549, %v523, %v548
        %vm551 = vcmask 1047559
        %v552 = vsel %vm551, %v530, %v550
        %554 = vst [vmem:[%s171] sm:$0xff] %v552
        %s555 = sand.u32 %s92, 1
        %s556 = scalar_lea.sflag [#allocation3], %s555
        %s557 = sand.u32 %s92, 1
        %s558 = smul.addr %s557, 8
        %s559 = scalar_lea.vmem [#allocation2], %s558
        // Predicated region
        $region29: #{tpu_custom_call.1} parent=27 // pred_check
          %p560 = pneg %p102
        $region30: #{tpu_custom_call.1} parent=27 // pred_check_branch
          %562 = sbr.rel (%p560) target = $region32
        $region31: #{tpu_custom_call.1} parent=27 // pred_region
          %s564 = ssub.s32 128, 128
          %565 = vsyncadd %s556, %s564
          %s566 = sadd.s32 %s21, %s20
          %s567 = smul.addr %s566, 128
          %s568 = scalar_lea.hbm %s2, %s567
          %s570 = sshll.u32 %s559, 4
          %s571 = int_to_ptr.vmem [resolvable:$true] %s570
          %573 = dma.vmem_to_hbm [thread:$0]  %s571, 128, %s568, %s556
        $region32: #{tpu_custom_call.1} parent=27 // pred_fallthru
          _
      $region28: #{tpu_custom_call.1} parent=5 // pred_fallthru
        _
      %p574 = scmp.le.s32.totalorder 2, %s11
      // Predicated region
      $region33: #{tpu_custom_call.1} parent=5 // pred_check
        %p575 = pneg %p574
      $region34: #{tpu_custom_call.1} parent=5 // pred_check_branch
        %577 = sbr.rel (%p575) target = $region36
      $region35: #{tpu_custom_call.1} parent=5 // pred_region
        %s578 = ssub.s32 %s11, 2
        // Predicated region
        $region37: #{tpu_custom_call.1} parent=35 // pred_check
          %p579 = pneg %p108
        $region38: #{tpu_custom_call.1} parent=35 // pred_check_branch
          %581 = sbr.rel (%p579) target = $region40
        $region39: #{tpu_custom_call.1} parent=35 // pred_region
          %s582 = sand.u32 %s93, 1
          %s583 = scalar_lea.sflag [#allocation3], %s582
          %s584 = sand.u32 %s93, 1
          %s585 = smul.addr %s584, 8
          %s586 = scalar_lea.vmem [#allocation2], %s585
          %587 = dma.done %s583, 128
        $region40: #{tpu_custom_call.1} parent=35 // pred_fallthru
          _
      $region36: #{tpu_custom_call.1} parent=5 // pred_fallthru
        _
    $region6: #{tpu_custom_call.1} parent=1 // loop_footer
      %s15 = sadd.s32 1, %s11
    $region7: #{tpu_custom_call.1} parent=1 // loop_footer_branch
      %10 = sbr.rel target = $region3
    $region8: #{tpu_custom_call.1} parent=1 // loop_exit
      _
    %588 = vsyncpa [#allocation3], 1
    %s589 = scalar_lea.sflag [#allocation3], 1
    %590 = vsyncpa %s589, 1

</llo_original>
